<compile_context>
chip_gen: v6e
topology: v6e:2x2x1
jax: 0.10.0
libtpu: 0.0.40
codegen_flags: <defaults>
</compile_context>

<pallas_src>
import numpy as np
import jax
import jax.numpy as jnp
from jax import lax
from jax.experimental import pallas as pl
from jax.experimental.pallas import tpu as pltpu

KH = KW = 3      # depthwise kernel size (kernel_size=3)
PAD = 1          # padding=1, stride=1, dilation=1 (BSConvU defaults)


def _make_kernel(taps):
    """taps: static list of (tap_index, flat_offset) for the 8 non-center taps."""

    def kernel(x_ref, wpw_ref, wdw_ref, b_ref, mask_ref, o_ref):
        """
        x_ref   : (Cin,  L)   input block, L = b_blk * HWp (lane axis)
        wpw_ref : (Cout, Cin) pointwise 1x1 weights
        wdw_ref : (Cout, 9)   depthwise 3x3 weights, column = kh*3+kw
        b_ref   : (Cout, 1)   depthwise bias
        mask_ref: (9,    L)   0/1 tap-validity mask (row halo / col & image wrap)
        o_ref   : (Cout, L)   output block
        """
        L = x_ref.shape[-1]
        wpw = wpw_ref[...]                                   # (Cout, Cin)
        wdw = wdw_ref[...]                                   # (Cout, 9)   f32
        bias = b_ref[...]                                    # (Cout, 1)   f32
        mask = mask_ref[...]                                 # (9, L) — hoisted, one load/step

        # ---- 1x1 pointwise conv: single wide MXU matmul, f32 accumulation.
        y = jnp.dot(wpw, x_ref[...],
                    preferred_element_type=jnp.float32)      # (Cout, L) f32

        # ---- 3x3 depthwise: center tap with bias folded in, then 8 rolled taps.
        acc = y * wdw[:, 4:5] + bias
        for idx, s in taps:
            # out[p] = y[(p + s) mod L]; mask zeros every wrapped / out-of-image pixel.
            v = pltpu.roll(y, shift=(-s) % L, axis=1)        # XLU slot (VALU has no slack)
            acc = acc + v * mask[idx:idx + 1, :] * wdw[:, idx:idx + 1]

        o_ref[...] = acc.astype(o_ref.dtype)

    return kernel


def _pick_batch_block(N, stream_per_img, vmem_per_img, vmem_budget,
                      target_stream_bytes=4 << 20):
    """Batch block: big enough to amortize the ~0.35us per-grid-step pipeline
    overhead (~4 MiB of streamed in+out bytes per step), small enough for the
    generation-specific VMEM budget, a divisor of N, keeping >= 2 (preferably an
    even number of) grid steps for megacore load balance."""
    cap = min(max(1, target_stream_bytes // max(stream_per_img, 1)),
              max(1, vmem_budget // max(vmem_per_img, 1)))
    if N >= 2:
        cap = min(cap, N // 2)                 # at least two grid steps
    b = max(1, min(cap, N))
    while N % b:                               # divisor of N
        b -= 1
    if (N // b) % 2 and (N // b) > 1:          # prefer an even step count (v7x: 2 TCs)
        for b2 in range(b - 1, 0, -1):
            if N % b2 == 0 and (N // b2) % 2 == 0:
                b = b2
                break
    return b


def bsconv_u_pallas(x_nchw, w_pw, w_dw, b_dw, *, compute_dtype=jnp.float32,
                    out_dtype=jnp.float32):
    """x_nchw: (N, Cin, H, W); w_pw: (Cout, Cin, 1, 1); w_dw: (Cout, 1, 3, 3); b_dw: (Cout,).

    compute_dtype: dtype of the MXU matmul operands (jnp.bfloat16 on v6e/v7x halves
    activation/weight DMA traffic; accumulation and the depthwise tail stay f32).
    out_dtype: output dtype (bf16 is an option on v7x if the consumer accepts it).
    """
    N, Cin, H, W = x_nchw.shape
    Cout = w_pw.shape[0]
    HW = H * W
    HWp = ((HW + 127) // 128) * 128            # lane-dense flat spatial length

    in_bytes = np.dtype(compute_dtype).itemsize
    out_bytes = np.dtype(out_dtype).itemsize

    # Generation-aware VMEM sizing (v7x: 64 MiB physical; v5e/v6e: 128 MiB).
    try:
        phys_vmem = int(pltpu.get_tpu_info().vmem_capacity_bytes)
    except Exception:
        phys_vmem = 64 << 20                   # assume the smallest (v7x per-TC)
    vmem_limit = min((phys_vmem * 3) // 4, 96 << 20)
    vmem_budget = vmem_limit // 2              # headroom for compiler scratch / pipelining

    # Streamed bytes per image (in + out) and a conservative VMEM estimate
    # (double-buffered streams + double-buffered mask + f32 intermediates).
    stream_per_img = HWp * (Cin * in_bytes + Cout * out_bytes)
    vmem_per_img = 2 * stream_per_img + 2 * 9 * HWp * 4 + 3 * Cout * HWp * 4
    b_blk = _pick_batch_block(N, stream_per_img, vmem_per_img, vmem_budget)
    grid_n = N // b_blk
    L = b_blk * HWp
    # TODO(synk): add spatial (row) tiling with a 1-row halo for production image
    # sizes where per-image (Cout, HWp) f32 intermediates would not fit VMEM.
    # TODO(synk): evaluate pltpu.CORE_PARALLEL on the batch axis for v7x.

    # ---- layout plumbing (wrapper-side) so the kernel sees lane-dense 2D slabs.
    x = jnp.transpose(x_nchw.reshape(N, Cin, HW), (1, 0, 2))      # (Cin, N, HW)
    if HWp != HW:
        x = jnp.pad(x, ((0, 0), (0, 0), (0, HWp - HW)))
    x2d = x.reshape(Cin, N * HWp).astype(compute_dtype)           # (Cin, N*HWp)

    wpw = w_pw[:, :, 0, 0].astype(compute_dtype)                  # (Cout, Cin)
    wdw = w_dw[:, 0, :, :].reshape(Cout, KH * KW).astype(jnp.float32)  # (Cout, 9)
    bias = b_dw.reshape(Cout, 1).astype(jnp.float32)              # (Cout, 1)

    # 0/1 tap-validity masks (host-side numpy).  Zero outside the image (row/col
    # halo), in the lane padding, and therefore at every wrap-around point of the
    # rolled taps — including wraps across image boundaries inside the fused axis.
    pp = np.arange(HWp)
    hh, ww = pp // W, pp % W
    in_img = pp < HW
    masks = np.zeros((KH * KW, HWp), np.float32)
    for kh in range(KH):
        for kw in range(KW):
            dh, dw = kh - 1, kw - 1
            ok = in_img & (hh + dh >= 0) & (hh + dh < H) & (ww + dw >= 0) & (ww + dw < W)
            masks[kh * KW + kw] = ok.astype(np.float32)
    masks = jnp.asarray(np.tile(masks, (1, b_blk)))               # (9, L)

    taps = [(kh * KW + kw, (kh - 1) * W + (kw - 1))
            for kh in range(KH) for kw in range(KW) if not (kh == 1 and kw == 1)]

    flops = 2 * N * HWp * Cin * Cout + (3 * 8 + 2) * N * HWp * Cout
    bytes_accessed = (int(x2d.size) * in_bytes + N * HWp * Cout * out_bytes
                      + int(wpw.size) * in_bytes + int(wdw.size) * 4
                      + int(bias.size) * 4 + int(masks.size) * 4)

    out2d = pl.pallas_call(
        _make_kernel(taps),
        out_shape=jax.ShapeDtypeStruct((Cout, N * HWp), out_dtype),
        grid_spec=pltpu.PrefetchScalarGridSpec(
            num_scalar_prefetch=0,
            grid=(grid_n,),
            in_specs=[
                pl.BlockSpec((Cin, L), lambda n: (0, n)),
                pl.BlockSpec((Cout, Cin), lambda n: (0, 0)),
                pl.BlockSpec((Cout, KH * KW), lambda n: (0, 0)),
                pl.BlockSpec((Cout, 1), lambda n: (0, 0)),
                pl.BlockSpec((KH * KW, L), lambda n: (0, 0)),
            ],
            out_specs=pl.BlockSpec((Cout, L), lambda n: (0, n)),
        ),
        compiler_params=pltpu.CompilerParams(
            dimension_semantics=("parallel",),
            vmem_limit_bytes=int(vmem_limit)),
        cost_estimate=pl.CostEstimate(flops=int(flops), transcendentals=0,
                                      bytes_accessed=int(bytes_accessed)),
    )(x2d, wpw, wdw, bias, masks)

    out = out2d.reshape(Cout, N, HWp)[:, :, :HW]                  # strip lane padding
    return jnp.transpose(out, (1, 0, 2)).reshape(N, Cout, H, W)   # back to NCHW


def bsconv_u_reference(x_nchw, w_pw, w_dw, b_dw):
    """Pure-JAX reference mirroring torch Conv2d semantics (NCHW)."""
    Cout = w_pw.shape[0]
    y = lax.conv_general_dilated(
        x_nchw, w_pw, window_strides=(1, 1), padding="VALID",
        dimension_numbers=("NCHW", "OIHW", "NCHW"))
    z = lax.conv_general_dilated(
        y, w_dw, window_strides=(1, 1), padding=((PAD, PAD), (PAD, PAD)),
        dimension_numbers=("NCHW", "OIHW", "NCHW"), feature_group_count=Cout)
    return z + b_dw[None, :, None, None]


if __name__ == "__main__":
    # Small deterministic setup consistent with BSConvU(in_channels=4, out_channels=8).
    N, Cin, Cout, H, W = 2, 4, 8, 16, 16

    key = jax.random.PRNGKey(0)
    kx, kpw, kdw, kb = jax.random.split(key, 4)

    x = jax.random.normal(kx, (N, Cin, H, W), dtype=jnp.float32)
    w_pw = jax.random.normal(kpw, (Cout, Cin, 1, 1), dtype=jnp.float32) * 0.1
    w_dw = jax.random.normal(kdw, (Cout, 1, KH, KW), dtype=jnp.float32) * 0.1
    b_dw = jax.random.normal(kb, (Cout,), dtype=jnp.float32) * 0.1

    ref = jax.block_until_ready(bsconv_u_reference(x, w_pw, w_dw, b_dw))

    # f32 path — exact-ish match against the conv reference.
    out = jax.block_until_ready(bsconv_u_pallas(x, w_pw, w_dw, b_dw))
    assert out.shape == (N, Cout, H, W), out.shape
    assert jnp.allclose(out, ref, atol=1e-4, rtol=1e-4), float(jnp.max(jnp.abs(out - ref)))

    # bf16 operand path (v6e/v7x MXU fast path) — looser tolerance vs f32 reference.
    out_bf16 = jax.block_until_ready(
        bsconv_u_pallas(x, w_pw, w_dw, b_dw, compute_dtype=jnp.bfloat16))
    assert jnp.allclose(out_bf16, ref, atol=5e-2, rtol=5e-2), \
        float(jnp.max(jnp.abs(out_bf16 - ref)))

    print("KERNEL_OK")
</pallas_src>

<mosaic_0001>
module attributes {stable_mosaic.version = 11 : i64} {
  func.func @kernel(%arg0: i32, %arg1: memref<4x256xf32, #tpu.memory_space<vmem>>, %arg2: memref<8x4xf32, #tpu.memory_space<vmem>>, %arg3: memref<8x9xf32, #tpu.memory_space<vmem>>, %arg4: memref<8x1xf32, #tpu.memory_space<vmem>>, %arg5: memref<9x256xf32, #tpu.memory_space<vmem>>, %arg6: memref<8x256xf32, #tpu.memory_space<vmem>>) attributes {dimension_semantics = [#tpu.dimension_semantics<parallel>], iteration_bounds = array<i64: 2>, scalar_prefetch = 0 : i64, scratch_operands = 0 : i64, tpu.core_type = #tpu.core_type<tc>, window_params = [{transform_indices = @transform_0, window_bounds = array<i64: 4, 256>}, {pipeline_mode = #tpu.pipeline_mode<synchronous>, transform_indices = @transform_1, window_bounds = array<i64: 8, 4>}, {pipeline_mode = #tpu.pipeline_mode<synchronous>, transform_indices = @transform_2, window_bounds = array<i64: 8, 9>}, {pipeline_mode = #tpu.pipeline_mode<synchronous>, transform_indices = @transform_3, window_bounds = array<i64: 8, 1>}, {pipeline_mode = #tpu.pipeline_mode<synchronous>, transform_indices = @transform_4, window_bounds = array<i64: 9, 256>}, {transform_indices = @transform_5, window_bounds = array<i64: 8, 256>}]} {
    %c0 = arith.constant 0 : index
    %c0_0 = arith.constant 0 : index
    %0 = vector.load %arg2[%c0, %c0_0] : memref<8x4xf32, #tpu.memory_space<vmem>>, vector<8x4xf32>
    %c0_1 = arith.constant 0 : index
    %c0_2 = arith.constant 0 : index
    %1 = vector.load %arg3[%c0_1, %c0_2] : memref<8x9xf32, #tpu.memory_space<vmem>>, vector<8x9xf32>
    %c0_3 = arith.constant 0 : index
    %c0_4 = arith.constant 0 : index
    %2 = vector.load %arg4[%c0_3, %c0_4] : memref<8x1xf32, #tpu.memory_space<vmem>>, vector<8x1xf32>
    %c0_5 = arith.constant 0 : index
    %c0_6 = arith.constant 0 : index
    %3 = vector.load %arg5[%c0_5, %c0_6] : memref<9x256xf32, #tpu.memory_space<vmem>>, vector<9x256xf32>
    %c0_7 = arith.constant 0 : index
    %c0_8 = arith.constant 0 : index
    %4 = vector.load %arg1[%c0_7, %c0_8] : memref<4x256xf32, #tpu.memory_space<vmem>>, vector<4x256xf32>
    %cst = arith.constant dense<0.000000e+00> : vector<8x256xf32>
    %5 = tpu.matmul %0, %4, %cst {dimension_numbers = #tpu.dot_dimension_numbers<[1], [0], [0], [1], [0, 0, 1, 1], [], []>} : vector<8x4xf32>, vector<4x256xf32>, vector<8x256xf32> -> vector<8x256xf32>
    %6 = vector.extract_strided_slice %1 {offsets = [0, 4], sizes = [8, 1], strides = [1, 1]} : vector<8x9xf32> to vector<8x1xf32>
    %7 = vector.broadcast %6 : vector<8x1xf32> to vector<8x256xf32>
    %8 = arith.mulf %5, %7 : vector<8x256xf32>
    %9 = vector.broadcast %2 : vector<8x1xf32> to vector<8x256xf32>
    %10 = arith.addf %8, %9 : vector<8x256xf32>
    %c17_i32 = arith.constant 17 : i32
    %11 = tpu.dynamic_rotate %5 by %c17_i32 dim 1 : vector<8x256xf32>, i32 -> vector<8x256xf32>
    %12 = vector.extract_strided_slice %3 {offsets = [0, 0], sizes = [1, 256], strides = [1, 1]} : vector<9x256xf32> to vector<1x256xf32>
    %13 = vector.broadcast %12 : vector<1x256xf32> to vector<8x256xf32>
    %14 = arith.mulf %11, %13 : vector<8x256xf32>
    %15 = vector.extract_strided_slice %1 {offsets = [0, 0], sizes = [8, 1], strides = [1, 1]} : vector<8x9xf32> to vector<8x1xf32>
    %16 = vector.broadcast %15 : vector<8x1xf32> to vector<8x256xf32>
    %17 = arith.mulf %14, %16 : vector<8x256xf32>
    %18 = arith.addf %10, %17 : vector<8x256xf32>
    %c16_i32 = arith.constant 16 : i32
    %19 = tpu.dynamic_rotate %5 by %c16_i32 dim 1 : vector<8x256xf32>, i32 -> vector<8x256xf32>
    %20 = vector.extract_strided_slice %3 {offsets = [1, 0], sizes = [1, 256], strides = [1, 1]} : vector<9x256xf32> to vector<1x256xf32>
    %21 = vector.broadcast %20 : vector<1x256xf32> to vector<8x256xf32>
    %22 = arith.mulf %19, %21 : vector<8x256xf32>
    %23 = vector.extract_strided_slice %1 {offsets = [0, 1], sizes = [8, 1], strides = [1, 1]} : vector<8x9xf32> to vector<8x1xf32>
    %24 = vector.broadcast %23 : vector<8x1xf32> to vector<8x256xf32>
    %25 = arith.mulf %22, %24 : vector<8x256xf32>
    %26 = arith.addf %18, %25 : vector<8x256xf32>
    %c15_i32 = arith.constant 15 : i32
    %27 = tpu.dynamic_rotate %5 by %c15_i32 dim 1 : vector<8x256xf32>, i32 -> vector<8x256xf32>
    %28 = vector.extract_strided_slice %3 {offsets = [2, 0], sizes = [1, 256], strides = [1, 1]} : vector<9x256xf32> to vector<1x256xf32>
    %29 = vector.broadcast %28 : vector<1x256xf32> to vector<8x256xf32>
    %30 = arith.mulf %27, %29 : vector<8x256xf32>
    %31 = vector.extract_strided_slice %1 {offsets = [0, 2], sizes = [8, 1], strides = [1, 1]} : vector<8x9xf32> to vector<8x1xf32>
    %32 = vector.broadcast %31 : vector<8x1xf32> to vector<8x256xf32>
    %33 = arith.mulf %30, %32 : vector<8x256xf32>
    %34 = arith.addf %26, %33 : vector<8x256xf32>
    %c1_i32 = arith.constant 1 : i32
    %35 = tpu.dynamic_rotate %5 by %c1_i32 dim 1 : vector<8x256xf32>, i32 -> vector<8x256xf32>
    %36 = vector.extract_strided_slice %3 {offsets = [3, 0], sizes = [1, 256], strides = [1, 1]} : vector<9x256xf32> to vector<1x256xf32>
    %37 = vector.broadcast %36 : vector<1x256xf32> to vector<8x256xf32>
    %38 = arith.mulf %35, %37 : vector<8x256xf32>
    %39 = vector.extract_strided_slice %1 {offsets = [0, 3], sizes = [8, 1], strides = [1, 1]} : vector<8x9xf32> to vector<8x1xf32>
    %40 = vector.broadcast %39 : vector<8x1xf32> to vector<8x256xf32>
    %41 = arith.mulf %38, %40 : vector<8x256xf32>
    %42 = arith.addf %34, %41 : vector<8x256xf32>
    %c255_i32 = arith.constant 255 : i32
    %43 = tpu.dynamic_rotate %5 by %c255_i32 dim 1 : vector<8x256xf32>, i32 -> vector<8x256xf32>
    %44 = vector.extract_strided_slice %3 {offsets = [5, 0], sizes = [1, 256], strides = [1, 1]} : vector<9x256xf32> to vector<1x256xf32>
    %45 = vector.broadcast %44 : vector<1x256xf32> to vector<8x256xf32>
    %46 = arith.mulf %43, %45 : vector<8x256xf32>
    %47 = vector.extract_strided_slice %1 {offsets = [0, 5], sizes = [8, 1], strides = [1, 1]} : vector<8x9xf32> to vector<8x1xf32>
    %48 = vector.broadcast %47 : vector<8x1xf32> to vector<8x256xf32>
    %49 = arith.mulf %46, %48 : vector<8x256xf32>
    %50 = arith.addf %42, %49 : vector<8x256xf32>
    %c241_i32 = arith.constant 241 : i32
    %51 = tpu.dynamic_rotate %5 by %c241_i32 dim 1 : vector<8x256xf32>, i32 -> vector<8x256xf32>
    %52 = vector.extract_strided_slice %3 {offsets = [6, 0], sizes = [1, 256], strides = [1, 1]} : vector<9x256xf32> to vector<1x256xf32>
    %53 = vector.broadcast %52 : vector<1x256xf32> to vector<8x256xf32>
    %54 = arith.mulf %51, %53 : vector<8x256xf32>
    %55 = vector.extract_strided_slice %1 {offsets = [0, 6], sizes = [8, 1], strides = [1, 1]} : vector<8x9xf32> to vector<8x1xf32>
    %56 = vector.broadcast %55 : vector<8x1xf32> to vector<8x256xf32>
    %57 = arith.mulf %54, %56 : vector<8x256xf32>
    %58 = arith.addf %50, %57 : vector<8x256xf32>
    %c240_i32 = arith.constant 240 : i32
    %59 = tpu.dynamic_rotate %5 by %c240_i32 dim 1 : vector<8x256xf32>, i32 -> vector<8x256xf32>
    %60 = vector.extract_strided_slice %3 {offsets = [7, 0], sizes = [1, 256], strides = [1, 1]} : vector<9x256xf32> to vector<1x256xf32>
    %61 = vector.broadcast %60 : vector<1x256xf32> to vector<8x256xf32>
    %62 = arith.mulf %59, %61 : vector<8x256xf32>
    %63 = vector.extract_strided_slice %1 {offsets = [0, 7], sizes = [8, 1], strides = [1, 1]} : vector<8x9xf32> to vector<8x1xf32>
    %64 = vector.broadcast %63 : vector<8x1xf32> to vector<8x256xf32>
    %65 = arith.mulf %62, %64 : vector<8x256xf32>
    %66 = arith.addf %58, %65 : vector<8x256xf32>
    %c239_i32 = arith.constant 239 : i32
    %67 = tpu.dynamic_rotate %5 by %c239_i32 dim 1 : vector<8x256xf32>, i32 -> vector<8x256xf32>
    %68 = vector.extract_strided_slice %3 {offsets = [8, 0], sizes = [1, 256], strides = [1, 1]} : vector<9x256xf32> to vector<1x256xf32>
    %69 = vector.broadcast %68 : vector<1x256xf32> to vector<8x256xf32>
    %70 = arith.mulf %67, %69 : vector<8x256xf32>
    %71 = vector.extract_strided_slice %1 {offsets = [0, 8], sizes = [8, 1], strides = [1, 1]} : vector<8x9xf32> to vector<8x1xf32>
    %72 = vector.broadcast %71 : vector<8x1xf32> to vector<8x256xf32>
    %73 = arith.mulf %70, %72 : vector<8x256xf32>
    %74 = arith.addf %66, %73 : vector<8x256xf32>
    %c0_9 = arith.constant 0 : index
    %c0_10 = arith.constant 0 : index
    %75 = vector.load %arg6[%c0_9, %c0_10] : memref<8x256xf32, #tpu.memory_space<vmem>>, vector<8x256xf32>
    tpu.vector_store %arg6[%c0_9, %c0_10], %74 {strides = array<i32>} : memref<8x256xf32, #tpu.memory_space<vmem>>, vector<8x256xf32>,
    return
  }
  func.func @transform_0(%arg0: i32) -> (i32, i32) {
    %c0_i32 = arith.constant 0 : i32
    %c0_i32_0 = arith.constant 0 : i32
    return %c0_i32, %arg0 : i32, i32
  }
  func.func @transform_1(%arg0: i32) -> (i32, i32) {
    %c0_i32 = arith.constant 0 : i32
    %c0_i32_0 = arith.constant 0 : i32
    %c0_i32_1 = arith.constant 0 : i32
    return %c0_i32, %c0_i32_0 : i32, i32
  }
  func.func @transform_2(%arg0: i32) -> (i32, i32) {
    %c0_i32 = arith.constant 0 : i32
    %c0_i32_0 = arith.constant 0 : i32
    %c0_i32_1 = arith.constant 0 : i32
    return %c0_i32, %c0_i32_0 : i32, i32
  }
  func.func @transform_3(%arg0: i32) -> (i32, i32) {
    %c0_i32 = arith.constant 0 : i32
    %c0_i32_0 = arith.constant 0 : i32
    %c0_i32_1 = arith.constant 0 : i32
    return %c0_i32, %c0_i32_0 : i32, i32
  }
  func.func @transform_4(%arg0: i32) -> (i32, i32) {
    %c0_i32 = arith.constant 0 : i32
    %c0_i32_0 = arith.constant 0 : i32
    %c0_i32_1 = arith.constant 0 : i32
    return %c0_i32, %c0_i32_0 : i32, i32
  }
  func.func @transform_5(%arg0: i32) -> (i32, i32) {
    %c0_i32 = arith.constant 0 : i32
    %c0_i32_0 = arith.constant 0 : i32
    return %c0_i32, %arg0 : i32, i32
  }
}

</mosaic_0001>

<llo_original>
// kernel: tpu_custom_call.1
$region0: #{tpu_custom_call.1}
  #allocation0 [shape = 'u32[]', space=smem, size = 0x4, offset = 0x4, fixed_abs, tag = 'smem constant byte address 0x4 - core index']
  #allocation1 [shape = 'u32[144,128]{1,0:T(1,128)}', space=vmem, size = 0x12000, scoped, tag = 'internal scratch']
  %s0 = inlined_call_operand.vmem [shape: f32[4,512], index: 0, kind: input, shape index: {}]
  %s1 = inlined_call_operand.vmem [shape: f32[8,4], index: 1, kind: input, shape index: {}]
  %s2 = inlined_call_operand.vmem [shape: f32[8,9], index: 2, kind: input, shape index: {}]
  %s3 = inlined_call_operand.vmem [shape: f32[8,1], index: 3, kind: input, shape index: {}]
  %s4 = inlined_call_operand.hbm [shape: f32[9,256], index: 4, kind: input, shape index: {}]
  %s5 = inlined_call_operand.hbm [shape: f32[8,512], index: 5, kind: output, shape index: {}]
  %s6 = sld [smem:[#allocation0]]
  $region57: #{tpu_custom_call.1} parent=0
    _
  %s8 = ssub.s32 1, %s6
  %s9 = scalar_select 0, %s8, %s6
  $region1: #{tpu_custom_call.1} parent=0
    #allocation2 [shape = 'u8[16384]{0}', space=vmem, size = 0x4000, scoped, tag = 'input window, operand 4, single buffered']
    #allocation3 [shape = 's32[2]{0}', space=sflag, size = 0x8, scoped, tag = 'scoped memory for tpu_custom_call.1']
    #allocation4 [shape = 's32[2]{0}', space=sflag, size = 0x8, scoped, tag = 'scoped memory for tpu_custom_call.1']
    #allocation5 [shape = 'u8[16384]{0}', space=vmem, size = 0x4000, scoped, tag = 'output window, operand 0']
    %10 = vsyncpa [#allocation3], 0
    %11 = vsyncpa [#allocation4], 0
    %s12 = scalar_lea.sflag [#allocation4], 1
    %13 = vsyncpa %s12, 0
    loop: start=0, step=1, limit=4
    $region2: #{tpu_custom_call.1} parent=1 // loop_pre_header
      _
    $region3: #{tpu_custom_call.1} parent=1 // loop_header
      %s15 = sphi 0, %s19
      %p16 = scmp.ge.s32.totalorder %s15, 4
      %s25 = sphi 0, %s27
      %s28 = sphi 0, %s25
      %s29 = sphi 0, %s28
      %s45 = sphi 0, %s29
      %s49 = sphi 0, %s49
      %s51 = sphi 0, %s49
      %s52 = sphi 0, %s51
      %s66 = sphi 0, %s52
      %s70 = sphi 0, %s70
      %s72 = sphi 0, %s70
      %s73 = sphi 0, %s72
      %s87 = sphi 0, %s73
      %s91 = sphi 0, %s91
      %s93 = sphi 0, %s91
      %s94 = sphi 0, %s93
      %s108 = sphi 0, %s94
      %s112 = sphi 0, %s112
      %s114 = sphi 0, %s112
      %s115 = sphi 0, %s114
      %s129 = sphi 0, %s115
      %s135 = sphi 0, %s137
      %s138 = sphi 0, %s135
      %s139 = sphi 0, %s138
      %s155 = sphi 0, %s139
    $region4: #{tpu_custom_call.1} parent=1 // loop_header_branch
      %18 = sbr.rel (%p16) target = $region8
    $region5: #{tpu_custom_call.1} parent=1 // loop_body
      %s20 = ssub.s32 %s15, 1
      %s21 = ssub.s32 %s15, 2
      %s22 = sadd.s32 %s15, 1
      %s23 = ssub.s32 %s15, %s22
      %p24 = scmp.eq.s32.totalorder %s23, 0
      %s26 = sadd.s32 %s25, 1
      %s27 = scalar_select %p24, %s25, %s26
      %p30 = pneg %p24
      %p31 = scmp.eq.s32.totalorder %s15, 1
      %p32 = por %p30, %p31
      %p33 = scmp.ne.s32.totalorder %s25, %s28
      %p34 = scmp.eq.s32.totalorder %s15, 0
      %p35 = por %p33, %p34
      %p36 = scmp.ne.s32.totalorder %s25, %s28
      %p37 = scmp.eq.s32.totalorder %s20, 1
      %p38 = por %p36, %p37
      %p39 = scmp.ne.s32.totalorder %s28, %s29
      %p40 = scmp.eq.s32.totalorder %s20, 0
      %p41 = por %p39, %p40
      %p42 = scmp.ne.s32.totalorder %s28, %s29
      %p43 = scmp.eq.s32.totalorder %s21, 1
      %p44 = por %p42, %p43
      %p46 = scmp.ne.s32.totalorder %s29, %s45
      %p47 = scmp.eq.s32.totalorder %s21, 0
      %p48 = por %p46, %p47
      %s50 = sadd.s32 %s49, 1
      %p53 = scmp.eq.s32.totalorder %s15, 1
      %p54 = scmp.ne.s32.totalorder %s49, %s51
      %p55 = scmp.eq.s32.totalorder %s15, 0
      %p56 = por %p54, %p55
      %p57 = scmp.ne.s32.totalorder %s49, %s51
      %p58 = scmp.eq.s32.totalorder %s20, 1
      %p59 = por %p57, %p58
      %p60 = scmp.ne.s32.totalorder %s51, %s52
      %p61 = scmp.eq.s32.totalorder %s20, 0
      %p62 = por %p60, %p61
      %p63 = scmp.ne.s32.totalorder %s51, %s52
      %p64 = scmp.eq.s32.totalorder %s21, 1
      %p65 = por %p63, %p64
      %p67 = scmp.ne.s32.totalorder %s52, %s66
      %p68 = scmp.eq.s32.totalorder %s21, 0
      %p69 = por %p67, %p68
      %s71 = sadd.s32 %s70, 1
      %p74 = scmp.eq.s32.totalorder %s15, 1
      %p75 = scmp.ne.s32.totalorder %s70, %s72
      %p76 = scmp.eq.s32.totalorder %s15, 0
      %p77 = por %p75, %p76
      %p78 = scmp.ne.s32.totalorder %s70, %s72
      %p79 = scmp.eq.s32.totalorder %s20, 1
      %p80 = por %p78, %p79
      %p81 = scmp.ne.s32.totalorder %s72, %s73
      %p82 = scmp.eq.s32.totalorder %s20, 0
      %p83 = por %p81, %p82
      %p84 = scmp.ne.s32.totalorder %s72, %s73
      %p85 = scmp.eq.s32.totalorder %s21, 1
      %p86 = por %p84, %p85
      %p88 = scmp.ne.s32.totalorder %s73, %s87
      %p89 = scmp.eq.s32.totalorder %s21, 0
      %p90 = por %p88, %p89
      %s92 = sadd.s32 %s91, 1
      %p95 = scmp.eq.s32.totalorder %s15, 1
      %p96 = scmp.ne.s32.totalorder %s91, %s93
      %p97 = scmp.eq.s32.totalorder %s15, 0
      %p98 = por %p96, %p97
      %p99 = scmp.ne.s32.totalorder %s91, %s93
      %p100 = scmp.eq.s32.totalorder %s20, 1
      %p101 = por %p99, %p100
      %p102 = scmp.ne.s32.totalorder %s93, %s94
      %p103 = scmp.eq.s32.totalorder %s20, 0
      %p104 = por %p102, %p103
      %p105 = scmp.ne.s32.totalorder %s93, %s94
      %p106 = scmp.eq.s32.totalorder %s21, 1
      %p107 = por %p105, %p106
      %p109 = scmp.ne.s32.totalorder %s94, %s108
      %p110 = scmp.eq.s32.totalorder %s21, 0
      %p111 = por %p109, %p110
      %s113 = sadd.s32 %s112, 1
      %p116 = scmp.eq.s32.totalorder %s15, 1
      %p117 = scmp.ne.s32.totalorder %s112, %s114
      %p118 = scmp.eq.s32.totalorder %s15, 0
      %p119 = por %p117, %p118
      %p120 = scmp.ne.s32.totalorder %s112, %s114
      %p121 = scmp.eq.s32.totalorder %s20, 1
      %p122 = por %p120, %p121
      %p123 = scmp.ne.s32.totalorder %s114, %s115
      %p124 = scmp.eq.s32.totalorder %s20, 0
      %p125 = por %p123, %p124
      %p126 = scmp.ne.s32.totalorder %s114, %s115
      %p127 = scmp.eq.s32.totalorder %s21, 1
      %p128 = por %p126, %p127
      %p130 = scmp.ne.s32.totalorder %s115, %s129
      %p131 = scmp.eq.s32.totalorder %s21, 0
      %p132 = por %p130, %p131
      %s133 = ssub.s32 %s15, %s22
      %p134 = scmp.eq.s32.totalorder %s133, 0
      %s136 = sadd.s32 %s135, 1
      %s137 = scalar_select %p134, %s135, %s136
      %p140 = pneg %p134
      %p141 = scmp.eq.s32.totalorder %s15, 1
      %p142 = por %p140, %p141
      %p143 = scmp.ne.s32.totalorder %s135, %s138
      %p144 = scmp.eq.s32.totalorder %s15, 0
      %p145 = por %p143, %p144
      %p146 = scmp.ne.s32.totalorder %s135, %s138
      %p147 = scmp.eq.s32.totalorder %s20, 1
      %p148 = por %p146, %p147
      %p149 = scmp.ne.s32.totalorder %s138, %s139
      %p150 = scmp.eq.s32.totalorder %s20, 0
      %p151 = por %p149, %p150
      %p152 = scmp.ne.s32.totalorder %s138, %s139
      %p153 = scmp.eq.s32.totalorder %s21, 1
      %p154 = por %p152, %p153
      %p156 = scmp.ne.s32.totalorder %s139, %s155
      %p157 = scmp.eq.s32.totalorder %s21, 0
      %p158 = por %p156, %p157
      %p159 = scmp.le.s32.totalorder 1, %s15
      %p160 = scmp.lt.s32.totalorder %s15, 3
      %p161 = pnand %p159, %p160
      %p162 = pneg %p161
      // Predicated region
      $region9: #{tpu_custom_call.1} parent=5 // pred_check
        _
      $region10: #{tpu_custom_call.1} parent=5 // pred_check_branch
        %164 = sbr.rel (%p161) target = $region12
      $region11: #{tpu_custom_call.1} parent=5 // pred_region
        %s165 = ssub.s32 %s15, 1
        // Predicated region
        $region13: #{tpu_custom_call.1} parent=11 // pred_check
          %p166 = pneg %p62
        $region14: #{tpu_custom_call.1} parent=11 // pred_check_branch
          %168 = sbr.rel (%p166) target = $region16
        $region15: #{tpu_custom_call.1} parent=11 // pred_region
          _
        $region16: #{tpu_custom_call.1} parent=11 // pred_fallthru
          _
        // Predicated region
        $region17: #{tpu_custom_call.1} parent=11 // pred_check
          %p169 = pneg %p83
        $region18: #{tpu_custom_call.1} parent=11 // pred_check_branch
          %171 = sbr.rel (%p169) target = $region20
        $region19: #{tpu_custom_call.1} parent=11 // pred_region
          _
        $region20: #{tpu_custom_call.1} parent=11 // pred_fallthru
          _
        // Predicated region
        $region21: #{tpu_custom_call.1} parent=11 // pred_check
          %p172 = pneg %p104
        $region22: #{tpu_custom_call.1} parent=11 // pred_check_branch
          %174 = sbr.rel (%p172) target = $region24
        $region23: #{tpu_custom_call.1} parent=11 // pred_region
          _
        $region24: #{tpu_custom_call.1} parent=11 // pred_fallthru
          _
        // Predicated region
        $region25: #{tpu_custom_call.1} parent=11 // pred_check
          %p175 = pneg %p125
        $region26: #{tpu_custom_call.1} parent=11 // pred_check_branch
          %177 = sbr.rel (%p175) target = $region28
        $region27: #{tpu_custom_call.1} parent=11 // pred_region
          %s179 = ssub.s32 512, 512
          %180 = vsyncadd [#allocation3], %s179
          %s181 = sshll.u32 [#allocation2], 4
          %s182 = int_to_ptr.vmem [resolvable:$true] %s181
          %187 = dma.hbm_to_vmem [thread:$0]  %s4, 512, %s182, [#allocation3], 256, 256, 16
        $region28: #{tpu_custom_call.1} parent=11 // pred_fallthru
          _
      $region12: #{tpu_custom_call.1} parent=5 // pred_fallthru
        _
      %p188 = scmp.lt.s32.totalorder %s15, 2
      // Predicated region
      $region29: #{tpu_custom_call.1} parent=5 // pred_check
        %p189 = pneg %p188
      $region30: #{tpu_custom_call.1} parent=5 // pred_check_branch
        %191 = sbr.rel (%p189) target = $region32
      $region31: #{tpu_custom_call.1} parent=5 // pred_region
        // Predicated region
        $region33: #{tpu_custom_call.1} parent=31 // pred_check
          %p192 = pneg %p35
        $region34: #{tpu_custom_call.1} parent=31 // pred_check_branch
          %194 = sbr.rel (%p192) target = $region36
        $region35: #{tpu_custom_call.1} parent=31 // pred_region
          %s195 = smul.u32 2, %s15
          %p196 = scmp.lt.s32.totalorder %s195, 3
          %s197 = scalar_select %p196, %s195, 3
          %s198 = smul.addr %s197, 4
          %s199 = scalar_lea.vmem %s0, %s198
          %s200 = smul.u32 2, %s15
        $region36: #{tpu_custom_call.1} parent=31 // pred_fallthru
          _
      $region32: #{tpu_custom_call.1} parent=5 // pred_fallthru
        _
      %p201 = scmp.le.s32.totalorder 1, %s15
      %p202 = scmp.lt.s32.totalorder %s15, 3
      %p203 = pnand %p201, %p202
      %p204 = pneg %p203
      // Predicated region
      $region37: #{tpu_custom_call.1} parent=5 // pred_check
        _
      $region38: #{tpu_custom_call.1} parent=5 // pred_check_branch
        %206 = sbr.rel (%p203) target = $region40
      $region39: #{tpu_custom_call.1} parent=5 // pred_region
        %s207 = ssub.s32 %s15, 1
        // Predicated region
        $region41: #{tpu_custom_call.1} parent=39 // pred_check
          %p208 = pneg %p125
        $region42: #{tpu_custom_call.1} parent=39 // pred_check_branch
          %210 = sbr.rel (%p208) target = $region44
        $region43: #{tpu_custom_call.1} parent=39 // pred_region
          %211 = dma.done [#allocation3], 512
        $region44: #{tpu_custom_call.1} parent=39 // pred_fallthru
          _
        %s212 = smul.u32 2, %s20
        %p213 = scmp.lt.s32.totalorder %s212, 3
        %s214 = scalar_select %p213, %s212, 3
        %s215 = smul.addr %s214, 4
        %s216 = scalar_lea.vmem %s0, %s215
        %p217 = pneg %p41
        %p218 = pneg %p38
        %p219 = pneg %p62
        %p220 = pneg %p59
        %p221 = pneg %p83
        %p222 = pneg %p80
        %p223 = pneg %p104
        %p224 = pneg %p101
        %p225 = pneg %p125
        %p226 = pneg %p122
        %p227 = pneg %p151
        %p228 = pneg %p148
        %s229 = sand.u32 %s138, 1
        %s230 = scalar_lea.sflag [#allocation4], %s229
        %s231 = sand.u32 %s138, 1
        %s232 = smul.addr %s231, 16
        %s233 = scalar_lea.vmem [#allocation5], %s232
        %s234 = smul.u32 2, %s20
        %p235 = scmp.lt.s32.totalorder %s234, 3
        %s236 = scalar_select %p235, %s234, 3
        %s237 = smul.addr %s236, 4
        %s238 = scalar_lea.vmem %s0, %s237
        %s239 = smul.u32 2, %s20
        %s240 = smul.u32 2, %s20
        %v241 = vld [vmem:[%s1] sm:$0xff]
        %v242 = vld [vmem:[%s2] sm:$0xff]
        %v243 = vld [vmem:[%s3] sm:$0xff]
        %v244 = vld [vmem:[#allocation2] sm:$0xff]
        %v245 = vld [vmem:[#allocation2 + $0x8] sm:$0xff]
        %v246 = vld [vmem:[#allocation2 + $0x10] sm:$0x1]
        %v247 = vld [vmem:[#allocation2 + $0x18] sm:$0x1]
        %v248 = vld [vmem:[%s238] sm:$0xff]
        %v250 = vcombine.high %v248, %v248
        %vm251 = vcmask 31744
        %v253 = vsel %vm251, %v241, 0
        %vm255 = vcmask 1043456
        %v256 = vsel %vm255, %v248, 0
        %v258 = vsel %vm255, %v250, 0
        %260 = vmatprep.subr.mxu0 0.0
        %261 = vmatpush1.msra.mxu0 0.0
        %262 = vmatprep.subr.mxu0 0.0
        %263 = vmatpush1.msra.mxu0 0.0
        %264 = vmatprep.subr.mxu0 0.0
        %265 = vmatpush1.msra.mxu0 0.0
        %266 = vmatprep.subr.mxu0 0.0
        %267 = vmatpush1.msra.mxu0 0.0
        %268 = vmatprep.subr.mxu0 0.0
        %269 = vmatpush1.msra.mxu0 0.0
        %270 = vmatprep.subr.mxu0 0.0
        %271 = vmatpush1.msra.mxu0 0.0
        %272 = vmatprep.subr.mxu0 0.0
        %273 = vmatpush1.msra.mxu0 0.0
        %274 = vmatprep.subr.mxu0 0.0
        %275 = vmatpush1.msra.mxu0 0.0
        %276 = vmatprep.subr.mxu0 0.0
        %277 = vmatpush1.msra.mxu0 0.0
        %278 = vmatprep.subr.mxu0 0.0
        %279 = vmatpush1.msra.mxu0 0.0
        %280 = vmatprep.subr.mxu0 0.0
        %281 = vmatpush1.msra.mxu0 0.0
        %282 = vmatprep.subr.mxu0 0.0
        %283 = vmatpush1.msra.mxu0 0.0
        %284 = vmatprep.subr.mxu0 0.0
        %285 = vmatpush1.msra.mxu0 0.0
        %286 = vmatprep.subr.mxu0 0.0
        %287 = vmatpush1.msra.mxu0 0.0
        %288 = vmatprep.subr.mxu0 0.0
        %289 = vmatpush1.msra.mxu0 0.0
        %290 = vmatprep.subr.mxu0 %v258
        %291 = vmatpush1.msra.mxu0 %v256
        %292 = vmatprep.subr.mxu0 0.0
        %293 = vmatpush2.msra.mxu0 0.0
        %294 = vmatprep.subr.mxu0 0.0
        %295 = vmatpush2.msra.mxu0 0.0
        %296 = vmatprep.subr.mxu0 0.0
        %297 = vmatpush2.msra.mxu0 0.0
        %298 = vmatprep.subr.mxu0 0.0
        %299 = vmatpush2.msra.mxu0 0.0
        %300 = vmatprep.subr.mxu0 0.0
        %301 = vmatpush2.msra.mxu0 0.0
        %302 = vmatprep.subr.mxu0 0.0
        %303 = vmatpush2.msra.mxu0 0.0
        %304 = vmatprep.subr.mxu0 0.0
        %305 = vmatpush2.msra.mxu0 0.0
        %306 = vmatprep.subr.mxu0 0.0
        %307 = vmatpush2.msra.mxu0 0.0
        %308 = vmatprep.subr.mxu0 0.0
        %309 = vmatpush2.msra.mxu0 0.0
        %310 = vmatprep.subr.mxu0 0.0
        %311 = vmatpush2.msra.mxu0 0.0
        %312 = vmatprep.subr.mxu0 0.0
        %313 = vmatpush2.msra.mxu0 0.0
        %314 = vmatprep.subr.mxu0 0.0
        %315 = vmatpush2.msra.mxu0 0.0
        %316 = vmatprep.subr.mxu0 0.0
        %317 = vmatpush2.msra.mxu0 0.0
        %318 = vmatprep.subr.mxu0 0.0
        %319 = vmatpush2.msra.mxu0 0.0
        %320 = vmatprep.subr.mxu0 0.0
        %321 = vmatpush2.msra.mxu0 0.0
        %322 = vmatprep.subr.mxu0 0.0
        %323 = vmatpush2.msra.mxu0 0.0
        %324 = vmatprep.mubr.f32.mxu0 0.0
        %325 = vmatmul.mubr.f32.gmra.mxu0 %v253
        %v326 = vpop.f32.mrf.mxu0
        %v327 = vadd.f32 0.0, %v326
        %v328 = vpop.f32.mrf.mxu0
        %v329 = vadd.f32 0.0, %v328
        %330 = vdwg.mxu0
        %332 = vset.pattern.permute.xlu0 4
        %333 = vperm.xlu0 %332, %v242
        %v334 = vpop.permute.xlu0 %333
        %v336 = vmul.f32 %v327, %v334
        %v337 = vmul.f32 %v329, %v334
        %339 = vset.pattern.permute.xlu0 0
        %340 = vperm.xlu0 %339, %v243
        %v341 = vpop.permute.xlu0 %340
        %v343 = vadd.f32 %v336, %v341
        %v344 = vadd.f32 %v337, %v341
        %345 = vrot.lane.b32.xlu0 %v327, 17
        %v346 = vpop.permute.xlu0 %345
        %347 = vrot.lane.b32.xlu0 %v329, 17
        %v348 = vpop.permute.xlu0 %347
        %v349 = vlaneseq
        %v350 = vand.u32 %v349, 127
        %vm351 = vcmp.lt.s32.totalorder %v350, 17
        %v352 = vsel %vm351, %v346, %v348
        %v353 = vsel %vm351, %v348, %v346
        %v354 = vlaneseq
        %v355 = vshrl.u32 %v354, 7
        %v356 = vsub.s32 0, %v355
        %v357 = vrot.slane %v244, %v356
        %v358 = vlaneseq
        %v359 = vshrl.u32 %v358, 7
        %v360 = vsub.s32 0, %v359
        %v361 = vrot.slane %v245, %v360
        %v362 = vmul.f32 %v353, %v357
        %v363 = vmul.f32 %v352, %v361
        %364 = vset.pattern.permute.xlu0 0
        %365 = vperm.xlu0 %364, %v242
        %v366 = vpop.permute.xlu0 %365
        %v368 = vmul.f32 %v362, %v366
        %v369 = vmul.f32 %v363, %v366
        %v370 = vadd.f32 %v343, %v368
        %v371 = vadd.f32 %v344, %v369
        %372 = vrot.lane.b32.xlu0 %v327, 16
        %v373 = vpop.permute.xlu0 %372
        %374 = vrot.lane.b32.xlu0 %v329, 16
        %v375 = vpop.permute.xlu0 %374
        %vm376 = vcmp.lt.s32.totalorder %v350, 16
        %v377 = vsel %vm376, %v373, %v375
        %v378 = vsel %vm376, %v375, %v373
        %v379 = vlaneseq
        %v380 = vshrl.u32 %v379, 7
        %v381 = vsub.s32 1, %v380
        %v382 = vrot.slane %v244, %v381
        %v383 = vlaneseq
        %v384 = vshrl.u32 %v383, 7
        %v385 = vsub.s32 1, %v384
        %v386 = vrot.slane %v245, %v385
        %v387 = vmul.f32 %v378, %v382
        %v388 = vmul.f32 %v377, %v386
        %389 = vset.pattern.permute.xlu0 1
        %390 = vperm.xlu0 %389, %v242
        %v391 = vpop.permute.xlu0 %390
        %v393 = vmul.f32 %v387, %v391
        %v394 = vmul.f32 %v388, %v391
        %v395 = vadd.f32 %v370, %v393
        %v396 = vadd.f32 %v371, %v394
        %397 = vrot.lane.b32.xlu0 %v327, 15
        %v398 = vpop.permute.xlu0 %397
        %399 = vrot.lane.b32.xlu0 %v329, 15
        %v400 = vpop.permute.xlu0 %399
        %vm401 = vcmp.lt.s32.totalorder %v350, 15
        %v402 = vsel %vm401, %v398, %v400
        %v403 = vsel %vm401, %v400, %v398
        %v404 = vlaneseq
        %v405 = vshrl.u32 %v404, 7
        %v406 = vsub.s32 2, %v405
        %v407 = vrot.slane %v244, %v406
        %v408 = vlaneseq
        %v409 = vshrl.u32 %v408, 7
        %v410 = vsub.s32 2, %v409
        %v411 = vrot.slane %v245, %v410
        %v412 = vmul.f32 %v403, %v407
        %v413 = vmul.f32 %v402, %v411
        %414 = vset.pattern.permute.xlu0 2
        %415 = vperm.xlu0 %414, %v242
        %v416 = vpop.permute.xlu0 %415
        %v418 = vmul.f32 %v412, %v416
        %v419 = vmul.f32 %v413, %v416
        %v420 = vadd.f32 %v395, %v418
        %v421 = vadd.f32 %v396, %v419
        %422 = vrot.lane.b32.xlu0 %v327, 1
        %v423 = vpop.permute.xlu0 %422
        %424 = vrot.lane.b32.xlu0 %v329, 1
        %v425 = vpop.permute.xlu0 %424
        %vm426 = vcmp.lt.s32.totalorder %v350, 1
        %v427 = vsel %vm426, %v423, %v425
        %v428 = vsel %vm426, %v425, %v423
        %v429 = vlaneseq
        %v430 = vshrl.u32 %v429, 7
        %v431 = vsub.s32 3, %v430
        %v432 = vrot.slane %v244, %v431
        %v433 = vlaneseq
        %v434 = vshrl.u32 %v433, 7
        %v435 = vsub.s32 3, %v434
        %v436 = vrot.slane %v245, %v435
        %v437 = vmul.f32 %v428, %v432
        %v438 = vmul.f32 %v427, %v436
        %439 = vset.pattern.permute.xlu0 3
        %440 = vperm.xlu0 %439, %v242
        %v441 = vpop.permute.xlu0 %440
        %v443 = vmul.f32 %v437, %v441
        %v444 = vmul.f32 %v438, %v441
        %v445 = vadd.f32 %v420, %v443
        %v446 = vadd.f32 %v421, %v444
        %447 = vrot.lane.b32.xlu0 %v327, 127
        %v448 = vpop.permute.xlu0 %447
        %449 = vrot.lane.b32.xlu0 %v329, 127
        %v450 = vpop.permute.xlu0 %449
        %vm451 = vcmp.lt.s32.totalorder %v350, 127
        %v452 = vsel %vm451, %v448, %v450
        %v453 = vsel %vm451, %v450, %v448
        %v454 = vlaneseq
        %v455 = vshrl.u32 %v454, 7
        %v456 = vsub.s32 5, %v455
        %v457 = vrot.slane %v244, %v456
        %v458 = vlaneseq
        %v459 = vshrl.u32 %v458, 7
        %v460 = vsub.s32 5, %v459
        %v461 = vrot.slane %v245, %v460
        %v462 = vmul.f32 %v452, %v457
        %v463 = vmul.f32 %v453, %v461
        %464 = vset.pattern.permute.xlu0 5
        %465 = vperm.xlu0 %464, %v242
        %v466 = vpop.permute.xlu0 %465
        %v468 = vmul.f32 %v462, %v466
        %v469 = vmul.f32 %v463, %v466
        %v470 = vadd.f32 %v445, %v468
        %v471 = vadd.f32 %v446, %v469
        %472 = vrot.lane.b32.xlu0 %v327, 113
        %v473 = vpop.permute.xlu0 %472
        %474 = vrot.lane.b32.xlu0 %v329, 113
        %v475 = vpop.permute.xlu0 %474
        %vm476 = vcmp.lt.s32.totalorder %v350, 113
        %v477 = vsel %vm476, %v473, %v475
        %v478 = vsel %vm476, %v475, %v473
        %v479 = vlaneseq
        %v480 = vshrl.u32 %v479, 7
        %v481 = vsub.s32 6, %v480
        %v482 = vrot.slane %v244, %v481
        %v483 = vlaneseq
        %v484 = vshrl.u32 %v483, 7
        %v485 = vsub.s32 6, %v484
        %v486 = vrot.slane %v245, %v485
        %v487 = vmul.f32 %v477, %v482
        %v488 = vmul.f32 %v478, %v486
        %489 = vset.pattern.permute.xlu0 6
        %490 = vperm.xlu0 %489, %v242
        %v491 = vpop.permute.xlu0 %490
        %v493 = vmul.f32 %v487, %v491
        %v494 = vmul.f32 %v488, %v491
        %v495 = vadd.f32 %v470, %v493
        %v496 = vadd.f32 %v471, %v494
        %497 = vrot.lane.b32.xlu0 %v327, 112
        %v498 = vpop.permute.xlu0 %497
        %499 = vrot.lane.b32.xlu0 %v329, 112
        %v500 = vpop.permute.xlu0 %499
        %vm501 = vcmp.lt.s32.totalorder %v350, 112
        %v502 = vsel %vm501, %v498, %v500
        %v503 = vsel %vm501, %v500, %v498
        %v504 = vlaneseq
        %v505 = vshrl.u32 %v504, 7
        %v506 = vsub.s32 7, %v505
        %v507 = vrot.slane %v244, %v506
        %v508 = vlaneseq
        %v509 = vshrl.u32 %v508, 7
        %v510 = vsub.s32 7, %v509
        %v511 = vrot.slane %v245, %v510
        %v512 = vmul.f32 %v502, %v507
        %v513 = vmul.f32 %v503, %v511
        %514 = vset.pattern.permute.xlu0 7
        %515 = vperm.xlu0 %514, %v242
        %v516 = vpop.permute.xlu0 %515
        %v518 = vmul.f32 %v512, %v516
        %v519 = vmul.f32 %v513, %v516
        %v520 = vadd.f32 %v495, %v518
        %v521 = vadd.f32 %v496, %v519
        %522 = vrot.lane.b32.xlu0 %v327, 111
        %v523 = vpop.permute.xlu0 %522
        %524 = vrot.lane.b32.xlu0 %v329, 111
        %v525 = vpop.permute.xlu0 %524
        %vm526 = vcmp.lt.s32.totalorder %v350, 111
        %v527 = vsel %vm526, %v523, %v525
        %v528 = vsel %vm526, %v525, %v523
        %v529 = vlaneseq
        %v530 = vshrl.u32 %v529, 7
        %v531 = vsub.s32 0, %v530
        %v532 = vrot.slane %v246, %v531
        %v533 = vlaneseq
        %v534 = vshrl.u32 %v533, 7
        %v535 = vsub.s32 0, %v534
        %v536 = vrot.slane %v247, %v535
        %v537 = vmul.f32 %v527, %v532
        %v538 = vmul.f32 %v528, %v536
        %539 = vset.pattern.permute.xlu0 8
        %540 = vperm.xlu0 %539, %v242
        %v541 = vpop.permute.xlu0 %540
        %v543 = vmul.f32 %v537, %v541
        %v544 = vmul.f32 %v538, %v541
        %v545 = vadd.f32 %v520, %v543
        %v546 = vadd.f32 %v521, %v544
        %547 = vst [vmem:[%s233] sm:$0xff] %v545
        %548 = vst [vmem:[%s233 + $0x8] sm:$0xff] %v546
        %s549 = sand.u32 %s138, 1
        %s550 = scalar_lea.sflag [#allocation4], %s549
        %s551 = sand.u32 %s138, 1
        %s552 = smul.addr %s551, 16
        %s553 = scalar_lea.vmem [#allocation5], %s552
        // Predicated region
        $region45: #{tpu_custom_call.1} parent=39 // pred_check
          %p554 = pneg %p148
        $region46: #{tpu_custom_call.1} parent=39 // pred_check_branch
          %556 = sbr.rel (%p554) target = $region48
        $region47: #{tpu_custom_call.1} parent=39 // pred_region
          %s557 = smul.u32 2, %s20
          %s559 = ssub.s32 256, 256
          %560 = vsyncadd %s550, %s559
          %s561 = smul.addr %s557, 128
          %s562 = scalar_lea.hbm %s5, %s561
          %s564 = sshll.u32 %s553, 4
          %s565 = int_to_ptr.vmem [resolvable:$true] %s564
          %567 = dma.vmem_to_hbm [thread:$0]  %s565, 256, %s562, %s550
        $region48: #{tpu_custom_call.1} parent=39 // pred_fallthru
          _
      $region40: #{tpu_custom_call.1} parent=5 // pred_fallthru
        _
      %p568 = scmp.le.s32.totalorder 2, %s15
      // Predicated region
      $region49: #{tpu_custom_call.1} parent=5 // pred_check
        %p569 = pneg %p568
      $region50: #{tpu_custom_call.1} parent=5 // pred_check_branch
        %571 = sbr.rel (%p569) target = $region52
      $region51: #{tpu_custom_call.1} parent=5 // pred_region
        %s572 = ssub.s32 %s15, 2
        // Predicated region
        $region53: #{tpu_custom_call.1} parent=51 // pred_check
          %p573 = pneg %p154
        $region54: #{tpu_custom_call.1} parent=51 // pred_check_branch
          %575 = sbr.rel (%p573) target = $region56
        $region55: #{tpu_custom_call.1} parent=51 // pred_region
          %s576 = sand.u32 %s139, 1
          %s577 = scalar_lea.sflag [#allocation4], %s576
          %s578 = sand.u32 %s139, 1
          %s579 = smul.addr %s578, 16
          %s580 = scalar_lea.vmem [#allocation5], %s579
          %581 = dma.done %s577, 256
        $region56: #{tpu_custom_call.1} parent=51 // pred_fallthru
          _
      $region52: #{tpu_custom_call.1} parent=5 // pred_fallthru
        _
    $region6: #{tpu_custom_call.1} parent=1 // loop_footer
      %s19 = sadd.s32 1, %s15
    $region7: #{tpu_custom_call.1} parent=1 // loop_footer_branch
      %14 = sbr.rel target = $region3
    $region8: #{tpu_custom_call.1} parent=1 // loop_exit
      _
    %582 = vsyncpa [#allocation3], 1
    %s583 = scalar_lea.sflag [#allocation3], 1
    %584 = vsyncpa %s583, 1
    %585 = vsyncpa [#allocation4], 1
    %s586 = scalar_lea.sflag [#allocation4], 1
    %587 = vsyncpa %s586, 1

</llo_original>
